<compile_context>
chip_gen: v5e
topology: v5e:2x2
jax: 0.10.0
libtpu: 0.0.40
codegen_flags: <defaults>
</compile_context>

<pallas_src>
import functools
import math

import jax
import jax.numpy as jnp
from jax.experimental import pallas as pl
from jax.experimental.pallas import tpu as pltpu


def _rmsnorm_kernel(x_ref, scale_ref, bias_ref, o_ref, *, eps, inv_h):
    # x_ref: (row_tile, Hp) ; scale_ref/bias_ref: (1, Hp)
    x = x_ref[...].astype(jnp.float32)
    # Padded lanes (if any) are zero, so sum * (1/true_H) == mean over true H.
    ms = jnp.sum(x * x, axis=-1, keepdims=True) * inv_h      # (row_tile, 1)
    inv = jax.lax.rsqrt(ms + eps)                             # (row_tile, 1)
    scale = scale_ref[...].astype(jnp.float32)                # (1, Hp)
    bias = bias_ref[...].astype(jnp.float32)                  # (1, Hp)
    o_ref[...] = (x * inv * scale + bias).astype(o_ref.dtype)


def rmsnorm_pallas(x, scale, bias, axis=-1, eps=1e-8, row_tile=None):
    """RMSNorm over `axis` of x, scaled by `scale` and shifted by `bias`."""
    orig_shape = x.shape
    ndim = x.ndim
    axis = axis % ndim

    # NOTE: axis == last dim is the fast path.  For other axes the wrapper
    # does a moveaxis (an extra HBM round trip outside the kernel).
    # TODO(synk): fuse non-last-axis access into the BlockSpec index_map.
    x2 = jnp.moveaxis(x, axis, -1)
    moved_shape = x2.shape
    H = moved_shape[-1]
    M = int(math.prod(moved_shape[:-1])) if len(moved_shape) > 1 else 1
    x2 = x2.reshape(M, H)

    dtype = x.dtype
    itemsize = jnp.dtype(dtype).itemsize

    scale2 = jnp.asarray(scale, dtype=dtype).reshape(1, H)
    bias2 = jnp.asarray(bias, dtype=dtype).reshape(1, H)

    # Pad hidden (lane) dim to a multiple of 128 for lane-dense, unmasked
    # stores.  Zero-padding x/scale/bias keeps the math exact (sum / true_H).
    Hp = ((H + 127) // 128) * 128
    if Hp != H:
        pad = Hp - H
        x2 = jnp.pad(x2, ((0, 0), (0, pad)))
        scale2 = jnp.pad(scale2, ((0, 0), (0, pad)))
        bias2 = jnp.pad(bias2, ((0, 0), (0, pad)))

    # Sublane packing per dtype: 8 rows (4B), 16 (2B), 32 (1B).
    packing = max(8, 32 // max(1, itemsize))

    if row_tile is None:
        # Target ~4 MiB input blocks: on the measured HBM-roofline plateau
        # while staying VMEM-safe on v7x (64 MiB) with double buffering.
        target_block_bytes = 4 * 1024 * 1024
        rt = max(packing, target_block_bytes // (Hp * itemsize))
        rt = min(rt, 1024)
    else:
        rt = max(packing, int(row_tile))
    rt = max(packing, (rt // packing) * packing)

    # Don't exceed the (padded) number of rows, and keep >= 2 grid steps when
    # there is enough work so both v7x TensorCores get fed.
    m_pad = ((M + packing - 1) // packing) * packing
    rt = min(rt, m_pad)
    if m_pad >= 2 * packing and pl.cdiv(M, rt) < 2:
        rt = ((pl.cdiv(m_pad, 2) + packing - 1) // packing) * packing
    rt = max(rt, packing)

    grid = (pl.cdiv(M, rt),)

    kernel = functools.partial(_rmsnorm_kernel, eps=float(eps),
                               inv_h=1.0 / float(H))

    # VMEM budget: double-buffered x and out blocks, f32 working copies,
    # scale/bias, plus slack.  Clamped to stay inside v7x's 64 MiB.
    block_bytes = rt * Hp * itemsize
    vmem_needed = (2 * 2 * block_bytes          # x + out, double-buffered
                   + 2 * rt * Hp * 4            # f32 intermediates
                   + 4 * Hp * itemsize          # scale / bias
                   + (2 << 20))                 # slack
    vmem_limit = int(min(max(vmem_needed, 32 * 1024 * 1024),
                         60 * 1024 * 1024))

    cost = pl.CostEstimate(
        flops=4 * M * Hp,
        transcendentals=M,
        bytes_accessed=(2 * M * Hp + 2 * Hp) * itemsize,
    )

    out2 = pl.pallas_call(
        kernel,
        out_shape=jax.ShapeDtypeStruct((M, Hp), dtype),
        grid_spec=pltpu.PrefetchScalarGridSpec(
            num_scalar_prefetch=0,
            grid=grid,
            in_specs=[
                pl.BlockSpec((rt, Hp), lambda i: (i, 0)),
                pl.BlockSpec((1, Hp), lambda i: (0, 0)),
                pl.BlockSpec((1, Hp), lambda i: (0, 0)),
            ],
            out_specs=pl.BlockSpec((rt, Hp), lambda i: (i, 0)),
        ),
        compiler_params=pltpu.CompilerParams(
            dimension_semantics=("parallel",),
            vmem_limit_bytes=vmem_limit,
        ),
        cost_estimate=cost,
    )(x2, scale2, bias2)

    if Hp != H:
        out2 = out2[:, :H]
    out = out2.reshape(moved_shape)
    out = jnp.moveaxis(out, -1, axis)
    return out.reshape(orig_shape)


def rmsnorm_ref(x, scale, bias, axis=-1, eps=1e-8):
    xf = x.astype(jnp.float32)
    ms = jnp.mean(xf * xf, axis=axis, keepdims=True)
    inv = jax.lax.rsqrt(ms + eps)
    shape = [1] * x.ndim
    shape[axis % x.ndim] = x.shape[axis]
    s = jnp.asarray(scale, jnp.float32).reshape(shape)
    b = jnp.asarray(bias, jnp.float32).reshape(shape)
    return (xf * inv * s + b).astype(x.dtype)


if __name__ == "__main__":
    key = jax.random.PRNGKey(0)
    batch, seq, hidden = 2, 8, 32
    axis, eps = -1, 1e-8

    x = jax.random.normal(key, (batch, seq, hidden), dtype=jnp.float32)
    # Deterministic parameter init (RMSNormBlock takes externally-supplied
    # scale/bias; here we synthesize them in-script).
    scale = 1.0 + 0.01 * jnp.arange(hidden, dtype=jnp.float32)
    bias = 0.1 * jnp.sin(jnp.arange(hidden, dtype=jnp.float32))

    out = rmsnorm_pallas(x, scale, bias, axis=axis, eps=eps)
    out = jax.block_until_ready(out)

    ref = rmsnorm_ref(x, scale, bias, axis=axis, eps=eps)
    assert out.shape == x.shape and out.dtype == x.dtype
    assert jnp.allclose(out, ref, atol=1e-5, rtol=1e-5), "mismatch vs reference"

    print("KERNEL_OK")
</pallas_src>

<mosaic_0001>
module attributes {stable_mosaic.version = 11 : i64} {
  func.func @_rmsnorm_kernel(%arg0: i32, %arg1: memref<8x128xf32, #tpu.memory_space<vmem>>, %arg2: memref<1x128xf32, #tpu.memory_space<vmem>>, %arg3: memref<1x128xf32, #tpu.memory_space<vmem>>, %arg4: memref<8x128xf32, #tpu.memory_space<vmem>>) attributes {dimension_semantics = [#tpu.dimension_semantics<parallel>], iteration_bounds = array<i64: 2>, scalar_prefetch = 0 : i64, scratch_operands = 0 : i64, tpu.core_type = #tpu.core_type<tc>, window_params = [{transform_indices = @transform_0, window_bounds = array<i64: 8, 128>}, {pipeline_mode = #tpu.pipeline_mode<synchronous>, transform_indices = @transform_1, window_bounds = array<i64: 1, 128>}, {pipeline_mode = #tpu.pipeline_mode<synchronous>, transform_indices = @transform_2, window_bounds = array<i64: 1, 128>}, {transform_indices = @transform_3, window_bounds = array<i64: 8, 128>}]} {
    %c0 = arith.constant 0 : index
    %c0_0 = arith.constant 0 : index
    %0 = vector.load %arg1[%c0, %c0_0] : memref<8x128xf32, #tpu.memory_space<vmem>>, vector<8x128xf32>
    %1 = arith.mulf %0, %0 : vector<8x128xf32>
    %cst = arith.constant dense<0.000000e+00> : vector<8xf32>
    %2 = vector.multi_reduction <add>, %1, %cst [1] : vector<8x128xf32> to vector<8xf32>
    %3 = vector.shape_cast %2 : vector<8xf32> to vector<8x1xf32>
    %cst_1 = arith.constant 3.125000e-02 : f32
    %4 = vector.broadcast %cst_1 : f32 to vector<8x1xf32>
    %5 = arith.mulf %3, %4 : vector<8x1xf32>
    %cst_2 = arith.constant 9.99999993E-9 : f32
    %6 = vector.broadcast %cst_2 : f32 to vector<8x1xf32>
    %7 = arith.addf %5, %6 : vector<8x1xf32>
    %8 = math.rsqrt %7 : vector<8x1xf32>
    %c0_3 = arith.constant 0 : index
    %c0_4 = arith.constant 0 : index
    %9 = vector.load %arg2[%c0_3, %c0_4] : memref<1x128xf32, #tpu.memory_space<vmem>>, vector<1x128xf32>
    %c0_5 = arith.constant 0 : index
    %c0_6 = arith.constant 0 : index
    %10 = vector.load %arg3[%c0_5, %c0_6] : memref<1x128xf32, #tpu.memory_space<vmem>>, vector<1x128xf32>
    %11 = vector.broadcast %8 : vector<8x1xf32> to vector<8x128xf32>
    %12 = arith.mulf %0, %11 : vector<8x128xf32>
    %13 = vector.broadcast %9 : vector<1x128xf32> to vector<8x128xf32>
    %14 = arith.mulf %12, %13 : vector<8x128xf32>
    %15 = vector.broadcast %10 : vector<1x128xf32> to vector<8x128xf32>
    %16 = arith.addf %14, %15 : vector<8x128xf32>
    %c0_7 = arith.constant 0 : index
    %c0_8 = arith.constant 0 : index
    %17 = vector.load %arg4[%c0_7, %c0_8] : memref<8x128xf32, #tpu.memory_space<vmem>>, vector<8x128xf32>
    tpu.vector_store %arg4[%c0_7, %c0_8], %16 {strides = array<i32>} : memref<8x128xf32, #tpu.memory_space<vmem>>, vector<8x128xf32>,
    return
  }
  func.func @transform_0(%arg0: i32) -> (i32, i32) {
    %c0_i32 = arith.constant 0 : i32
    %c0_i32_0 = arith.constant 0 : i32
    return %arg0, %c0_i32 : i32, i32
  }
  func.func @transform_1(%arg0: i32) -> (i32, i32) {
    %c0_i32 = arith.constant 0 : i32
    %c0_i32_0 = arith.constant 0 : i32
    %c0_i32_1 = arith.constant 0 : i32
    return %c0_i32, %c0_i32_0 : i32, i32
  }
  func.func @transform_2(%arg0: i32) -> (i32, i32) {
    %c0_i32 = arith.constant 0 : i32
    %c0_i32_0 = arith.constant 0 : i32
    %c0_i32_1 = arith.constant 0 : i32
    return %c0_i32, %c0_i32_0 : i32, i32
  }
  func.func @transform_3(%arg0: i32) -> (i32, i32) {
    %c0_i32 = arith.constant 0 : i32
    %c0_i32_0 = arith.constant 0 : i32
    return %arg0, %c0_i32 : i32, i32
  }
}

</mosaic_0001>

<llo_original>
// kernel: tpu_custom_call.1
$region0: #{tpu_custom_call.1}
  #allocation0 [shape = 'u32[]', space=smem, size = 0x4, offset = 0x4, fixed_abs, tag = 'smem constant byte address 0x4 - core index']
  #allocation1 [shape = 'u32[72,128]{1,0:T(1,128)}', space=vmem, size = 0x9000, scoped, tag = 'internal scratch']
  %s0 = inlined_call_operand.hbm [shape: f32[16,128], index: 0, kind: input, shape index: {}]
  %s1 = inlined_call_operand.hbm [shape: f32[1,128], index: 1, kind: input, shape index: {}]
  %s2 = inlined_call_operand.vmem [shape: f32[1,128], index: 2, kind: input, shape index: {}]
  %s3 = inlined_call_operand.hbm [shape: f32[16,128], index: 3, kind: output, shape index: {}]
  %s4 = sld [smem:[#allocation0]]
  $region53: #{tpu_custom_call.1} parent=0
    _
  %s6 = ssub.s32 1, %s4
  %s7 = scalar_select 0, %s6, %s4
  $region1: #{tpu_custom_call.1} parent=0
    #allocation2 [shape = 'u8[8192]{0}', space=vmem, size = 0x2000, scoped, tag = 'input window, operand 0']
    #allocation3 [shape = 's32[2]{0}', space=sflag, size = 0x8, scoped, tag = 'scoped memory for tpu_custom_call.1']
    #allocation4 [shape = 's32[2]{0}', space=sflag, size = 0x8, scoped, tag = 'scoped memory for tpu_custom_call.1']
    #allocation5 [shape = 'u8[512]{0}', space=vmem, size = 0x400, scoped, tag = 'input window, operand 1, single buffered']
    #allocation6 [shape = 's32[1]{0}', space=sflag, size = 0x4, scoped, tag = 'scoped memory for tpu_custom_call.1']
    #allocation7 [shape = 'u8[8192]{0}', space=vmem, size = 0x2000, scoped, tag = 'output window, operand 0']
    %8 = vsyncpa [#allocation3], 0
    %s9 = scalar_lea.sflag [#allocation3], 1
    %10 = vsyncpa %s9, 0
    %11 = vsyncpa [#allocation6], 0
    %12 = vsyncpa [#allocation4], 0
    %s13 = scalar_lea.sflag [#allocation4], 1
    %14 = vsyncpa %s13, 0
    loop: start=0, step=1, limit=4
    $region2: #{tpu_custom_call.1} parent=1 // loop_pre_header
      _
    $region3: #{tpu_custom_call.1} parent=1 // loop_header
      %s16 = sphi 0, %s20
      %p17 = scmp.ge.s32.totalorder %s16, 4
      %s26 = sphi 0, %s28
      %s29 = sphi 0, %s26
      %s30 = sphi 0, %s29
      %s46 = sphi 0, %s30
      %s50 = sphi 0, %s50
      %s52 = sphi 0, %s50
      %s53 = sphi 0, %s52
      %s67 = sphi 0, %s53
      %s71 = sphi 0, %s71
      %s73 = sphi 0, %s71
      %s74 = sphi 0, %s73
      %s88 = sphi 0, %s74
      %s94 = sphi 0, %s96
      %s97 = sphi 0, %s94
      %s98 = sphi 0, %s97
      %s114 = sphi 0, %s98
    $region4: #{tpu_custom_call.1} parent=1 // loop_header_branch
      %19 = sbr.rel (%p17) target = $region8
    $region5: #{tpu_custom_call.1} parent=1 // loop_body
      %s21 = ssub.s32 %s16, 1
      %s22 = ssub.s32 %s16, 2
      %s23 = sadd.s32 %s16, 1
      %s24 = ssub.s32 %s16, %s23
      %p25 = scmp.eq.s32.totalorder %s24, 0
      %s27 = sadd.s32 %s26, 1
      %s28 = scalar_select %p25, %s26, %s27
      %p31 = pneg %p25
      %p32 = scmp.eq.s32.totalorder %s16, 1
      %p33 = por %p31, %p32
      %p34 = scmp.ne.s32.totalorder %s26, %s29
      %p35 = scmp.eq.s32.totalorder %s16, 0
      %p36 = por %p34, %p35
      %p37 = scmp.ne.s32.totalorder %s26, %s29
      %p38 = scmp.eq.s32.totalorder %s21, 1
      %p39 = por %p37, %p38
      %p40 = scmp.ne.s32.totalorder %s29, %s30
      %p41 = scmp.eq.s32.totalorder %s21, 0
      %p42 = por %p40, %p41
      %p43 = scmp.ne.s32.totalorder %s29, %s30
      %p44 = scmp.eq.s32.totalorder %s22, 1
      %p45 = por %p43, %p44
      %p47 = scmp.ne.s32.totalorder %s30, %s46
      %p48 = scmp.eq.s32.totalorder %s22, 0
      %p49 = por %p47, %p48
      %s51 = sadd.s32 %s50, 1
      %p54 = scmp.eq.s32.totalorder %s16, 1
      %p55 = scmp.ne.s32.totalorder %s50, %s52
      %p56 = scmp.eq.s32.totalorder %s16, 0
      %p57 = por %p55, %p56
      %p58 = scmp.ne.s32.totalorder %s50, %s52
      %p59 = scmp.eq.s32.totalorder %s21, 1
      %p60 = por %p58, %p59
      %p61 = scmp.ne.s32.totalorder %s52, %s53
      %p62 = scmp.eq.s32.totalorder %s21, 0
      %p63 = por %p61, %p62
      %p64 = scmp.ne.s32.totalorder %s52, %s53
      %p65 = scmp.eq.s32.totalorder %s22, 1
      %p66 = por %p64, %p65
      %p68 = scmp.ne.s32.totalorder %s53, %s67
      %p69 = scmp.eq.s32.totalorder %s22, 0
      %p70 = por %p68, %p69
      %s72 = sadd.s32 %s71, 1
      %p75 = scmp.eq.s32.totalorder %s16, 1
      %p76 = scmp.ne.s32.totalorder %s71, %s73
      %p77 = scmp.eq.s32.totalorder %s16, 0
      %p78 = por %p76, %p77
      %p79 = scmp.ne.s32.totalorder %s71, %s73
      %p80 = scmp.eq.s32.totalorder %s21, 1
      %p81 = por %p79, %p80
      %p82 = scmp.ne.s32.totalorder %s73, %s74
      %p83 = scmp.eq.s32.totalorder %s21, 0
      %p84 = por %p82, %p83
      %p85 = scmp.ne.s32.totalorder %s73, %s74
      %p86 = scmp.eq.s32.totalorder %s22, 1
      %p87 = por %p85, %p86
      %p89 = scmp.ne.s32.totalorder %s74, %s88
      %p90 = scmp.eq.s32.totalorder %s22, 0
      %p91 = por %p89, %p90
      %s92 = ssub.s32 %s16, %s23
      %p93 = scmp.eq.s32.totalorder %s92, 0
      %s95 = sadd.s32 %s94, 1
      %s96 = scalar_select %p93, %s94, %s95
      %p99 = pneg %p93
      %p100 = scmp.eq.s32.totalorder %s16, 1
      %p101 = por %p99, %p100
      %p102 = scmp.ne.s32.totalorder %s94, %s97
      %p103 = scmp.eq.s32.totalorder %s16, 0
      %p104 = por %p102, %p103
      %p105 = scmp.ne.s32.totalorder %s94, %s97
      %p106 = scmp.eq.s32.totalorder %s21, 1
      %p107 = por %p105, %p106
      %p108 = scmp.ne.s32.totalorder %s97, %s98
      %p109 = scmp.eq.s32.totalorder %s21, 0
      %p110 = por %p108, %p109
      %p111 = scmp.ne.s32.totalorder %s97, %s98
      %p112 = scmp.eq.s32.totalorder %s22, 1
      %p113 = por %p111, %p112
      %p115 = scmp.ne.s32.totalorder %s98, %s114
      %p116 = scmp.eq.s32.totalorder %s22, 0
      %p117 = por %p115, %p116
      %p118 = scmp.le.s32.totalorder 1, %s16
      %p119 = scmp.lt.s32.totalorder %s16, 3
      %p120 = pnand %p118, %p119
      %p121 = pneg %p120
      // Predicated region
      $region9: #{tpu_custom_call.1} parent=5 // pred_check
        _
      $region10: #{tpu_custom_call.1} parent=5 // pred_check_branch
        %123 = sbr.rel (%p120) target = $region12
      $region11: #{tpu_custom_call.1} parent=5 // pred_region
        %s124 = ssub.s32 %s16, 1
        // Predicated region
        $region13: #{tpu_custom_call.1} parent=11 // pred_check
          %p125 = pneg %p63
        $region14: #{tpu_custom_call.1} parent=11 // pred_check_branch
          %127 = sbr.rel (%p125) target = $region16
        $region15: #{tpu_custom_call.1} parent=11 // pred_region
          %129 = vsyncadd [#allocation6], 0
          %s131 = sshll.u32 %s1, 4
          %s132 = int_to_ptr.hbm [resolvable:$true] %s131
          %s133 = sshll.u32 [#allocation5], 4
          %s134 = int_to_ptr.vmem [resolvable:$true] %s133
          %136 = dma.hbm_to_vmem [thread:$0]  %s132, 16, %s134, [#allocation6]
        $region16: #{tpu_custom_call.1} parent=11 // pred_fallthru
          _
        // Predicated region
        $region17: #{tpu_custom_call.1} parent=11 // pred_check
          %p137 = pneg %p84
        $region18: #{tpu_custom_call.1} parent=11 // pred_check_branch
          %139 = sbr.rel (%p137) target = $region20
        $region19: #{tpu_custom_call.1} parent=11 // pred_region
          _
        $region20: #{tpu_custom_call.1} parent=11 // pred_fallthru
          _
      $region12: #{tpu_custom_call.1} parent=5 // pred_fallthru
        _
      %p140 = scmp.lt.s32.totalorder %s16, 2
      // Predicated region
      $region21: #{tpu_custom_call.1} parent=5 // pred_check
        %p141 = pneg %p140
      $region22: #{tpu_custom_call.1} parent=5 // pred_check_branch
        %143 = sbr.rel (%p141) target = $region24
      $region23: #{tpu_custom_call.1} parent=5 // pred_region
        // Predicated region
        $region25: #{tpu_custom_call.1} parent=23 // pred_check
          %p144 = pneg %p36
        $region26: #{tpu_custom_call.1} parent=23 // pred_check_branch
          %146 = sbr.rel (%p144) target = $region28
        $region27: #{tpu_custom_call.1} parent=23 // pred_region
          %s147 = sand.u32 %s26, 1
          %s148 = scalar_lea.sflag [#allocation3], %s147
          %s149 = sand.u32 %s26, 1
          %s150 = smul.addr %s149, 8
          %s151 = scalar_lea.vmem [#allocation2], %s150
          %153 = vsyncadd %s148, 0
          %s154 = smul.addr %s16, 8
          %s155 = scalar_lea.hbm %s0, %s154
          %s157 = sshll.u32 %s155, 4
          %s158 = int_to_ptr.hbm [resolvable:$true] %s157
          %s159 = sshll.u32 %s151, 4
          %s160 = int_to_ptr.vmem [resolvable:$true] %s159
          %162 = dma.hbm_to_vmem [thread:$0]  %s158, 128, %s160, %s148
        $region28: #{tpu_custom_call.1} parent=23 // pred_fallthru
          _
      $region24: #{tpu_custom_call.1} parent=5 // pred_fallthru
        _
      %p163 = scmp.le.s32.totalorder 1, %s16
      %p164 = scmp.lt.s32.totalorder %s16, 3
      %p165 = pnand %p163, %p164
      %p166 = pneg %p165
      // Predicated region
      $region29: #{tpu_custom_call.1} parent=5 // pred_check
        _
      $region30: #{tpu_custom_call.1} parent=5 // pred_check_branch
        %168 = sbr.rel (%p165) target = $region32
      $region31: #{tpu_custom_call.1} parent=5 // pred_region
        %s169 = ssub.s32 %s16, 1
        %s170 = sand.u32 %s29, 1
        %s171 = scalar_lea.sflag [#allocation3], %s170
        %s172 = sand.u32 %s29, 1
        %s173 = smul.addr %s172, 8
        %s174 = scalar_lea.vmem [#allocation2], %s173
        // Predicated region
        $region33: #{tpu_custom_call.1} parent=31 // pred_check
          %p175 = pneg %p42
        $region34: #{tpu_custom_call.1} parent=31 // pred_check_branch
          %177 = sbr.rel (%p175) target = $region36
        $region35: #{tpu_custom_call.1} parent=31 // pred_region
          %179 = dma.done %s171, 128
        $region36: #{tpu_custom_call.1} parent=31 // pred_fallthru
          _
        // Predicated region
        $region37: #{tpu_custom_call.1} parent=31 // pred_check
          %p180 = pneg %p63
        $region38: #{tpu_custom_call.1} parent=31 // pred_check_branch
          %182 = sbr.rel (%p180) target = $region40
        $region39: #{tpu_custom_call.1} parent=31 // pred_region
          %184 = dma.done [#allocation6], 16
        $region40: #{tpu_custom_call.1} parent=31 // pred_fallthru
          _
        %s185 = sand.u32 %s29, 1
        %s186 = scalar_lea.sflag [#allocation3], %s185
        %s187 = sand.u32 %s29, 1
        %s188 = smul.addr %s187, 8
        %s189 = scalar_lea.vmem [#allocation2], %s188
        %p190 = pneg %p42
        %p191 = pneg %p39
        %p192 = pneg %p63
        %p193 = pneg %p60
        %p194 = pneg %p84
        %p195 = pneg %p81
        %p196 = pneg %p110
        %p197 = pneg %p107
        %s198 = sand.u32 %s97, 1
        %s199 = scalar_lea.sflag [#allocation4], %s198
        %s200 = sand.u32 %s97, 1
        %s201 = smul.addr %s200, 8
        %s202 = scalar_lea.vmem [#allocation7], %s201
        %v203 = vld [vmem:[%s174] sm:$0xff]
        %v204 = vmul.f32 %v203, %v203
        %205 = vadd.xlane.f32.xlu0 %v204
        %v206 = vpop.xlane.xlu0 %205
        %v207 = vmul.f32 %v206, 0.03125
        %v208 = vadd.f32 %v207, 1e-08
        %v209 = vrsqrt.pop %v208
        %v210 = vmul.f32 %v209, %v208
        %v211 = vmul.f32 %v210, %v209
        %v212 = vmul.f32 0.5, %v211
        %v213 = vsub.f32 1.5, %v212
        %v214 = vmul.f32 %v209, %v213
        %vm215 = vweird.f32 %v208
        %vm216 = vweird.f32 %v209
        %vm217 = vmor %vm215, %vm216
        %v218 = vsel %vm217, %v209, %v214
        %v219 = vld [vmem:[#allocation5] sm:$0x1]
        %v220 = vld [vmem:[%s2] sm:$0x1]
        %v221 = vmul.f32 %v203, %v218
        %v223 = vperm.slane %v219, 0
        %v225 = vmul.f32 %v221, %v223
        %v227 = vperm.slane %v220, 0
        %v229 = vadd.f32 %v225, %v227
        %230 = vst [vmem:[%s202] sm:$0xff] %v229
        %s231 = sand.u32 %s97, 1
        %s232 = scalar_lea.sflag [#allocation4], %s231
        %s233 = sand.u32 %s97, 1
        %s234 = smul.addr %s233, 8
        %s235 = scalar_lea.vmem [#allocation7], %s234
        // Predicated region
        $region41: #{tpu_custom_call.1} parent=31 // pred_check
          %p236 = pneg %p107
        $region42: #{tpu_custom_call.1} parent=31 // pred_check_branch
          %238 = sbr.rel (%p236) target = $region44
        $region43: #{tpu_custom_call.1} parent=31 // pred_region
          %240 = vsyncadd %s232, 0
          %s241 = smul.addr %s21, 8
          %s242 = scalar_lea.hbm %s3, %s241
          %s244 = sshll.u32 %s235, 4
          %s245 = int_to_ptr.vmem [resolvable:$true] %s244
          %s246 = sshll.u32 %s242, 4
          %s247 = int_to_ptr.hbm [resolvable:$true] %s246
          %249 = dma.vmem_to_hbm [thread:$0]  %s245, 128, %s247, %s232
        $region44: #{tpu_custom_call.1} parent=31 // pred_fallthru
          _
      $region32: #{tpu_custom_call.1} parent=5 // pred_fallthru
        _
      %p250 = scmp.le.s32.totalorder 2, %s16
      // Predicated region
      $region45: #{tpu_custom_call.1} parent=5 // pred_check
        %p251 = pneg %p250
      $region46: #{tpu_custom_call.1} parent=5 // pred_check_branch
        %253 = sbr.rel (%p251) target = $region48
      $region47: #{tpu_custom_call.1} parent=5 // pred_region
        %s254 = ssub.s32 %s16, 2
        // Predicated region
        $region49: #{tpu_custom_call.1} parent=47 // pred_check
          %p255 = pneg %p113
        $region50: #{tpu_custom_call.1} parent=47 // pred_check_branch
          %257 = sbr.rel (%p255) target = $region52
        $region51: #{tpu_custom_call.1} parent=47 // pred_region
          %s258 = sand.u32 %s98, 1
          %s259 = scalar_lea.sflag [#allocation4], %s258
          %s260 = sand.u32 %s98, 1
          %s261 = smul.addr %s260, 8
          %s262 = scalar_lea.vmem [#allocation7], %s261
          %264 = dma.done %s259, 128
        $region52: #{tpu_custom_call.1} parent=47 // pred_fallthru
          _
      $region48: #{tpu_custom_call.1} parent=5 // pred_fallthru
        _
    $region6: #{tpu_custom_call.1} parent=1 // loop_footer
      %s20 = sadd.s32 1, %s16
    $region7: #{tpu_custom_call.1} parent=1 // loop_footer_branch
      %15 = sbr.rel target = $region3
    $region8: #{tpu_custom_call.1} parent=1 // loop_exit
      _
    %265 = vsyncpa [#allocation3], 1
    %s266 = scalar_lea.sflag [#allocation3], 1
    %267 = vsyncpa %s266, 1
    %268 = vsyncpa [#allocation6], 1
    %269 = vsyncpa [#allocation4], 1
    %s270 = scalar_lea.sflag [#allocation4], 1
    %271 = vsyncpa %s270, 1

</llo_original>
